<compile_context>
chip_gen: v5e
topology: v5e:2x2
jax: 0.10.0
libtpu: 0.0.40
codegen_flags: <defaults>
</compile_context>

<pallas_src>
import jax
import jax.numpy as jnp
from jax.experimental import pallas as pl
from jax.experimental.pallas import tpu as pltpu


def _round_up(n, m):
    return ((n + m - 1) // m) * m


def discriminator_kernel(x_ref, w1_ref, b1_ref, w2_ref, b2_ref, w3_ref, b3_ref,
                         o_ref):
    # x_ref: (TM, 784)   w1: (784, 256)   w2: (256, 128)   w3 (row): (1, 128)
    # b1: (1, 256)  b2: (1, 128)  b3: (1, 1) scalar in SMEM
    x = x_ref[...]
    h1 = jnp.dot(x, w1_ref[...], preferred_element_type=jnp.float32) + b1_ref[...]
    h1 = jnp.maximum(h1, 0.0)                                   # ReLU (VPU)
    h2 = jnp.dot(h1, w2_ref[...], preferred_element_type=jnp.float32) + b2_ref[...]
    h2 = jnp.maximum(h2, 0.0)                                   # ReLU (VPU)
    # N=1 "matmul" -> VPU multiply + lane reduce (XLU); keeps the MXU free and
    # avoids MXU push/pop latency on a 1-column result.
    out = jnp.sum(h2 * w3_ref[...], axis=-1, keepdims=True) + b3_ref[0, 0]
    o_ref[...] = out.astype(o_ref.dtype)


def discriminator_forward(x_nchw, params, tm=512):
    """x_nchw: (B, C, 28, 28) float32 -> (B, C, 1) float32."""
    w1, b1, w2, b2, w3, b3 = params
    B, C, H, W = x_nchw.shape
    K = H * W                                      # 784
    M = B * C
    x2d = x_nchw.reshape(M, K)                     # Flatten(start_dim=2), merge B,C

    # Row tile: multiple of 8 (sublane) and no larger than needed.
    TM = min(tm, _round_up(M, 8))
    M_pad = pl.cdiv(M, TM) * TM
    if M_pad != M:
        x2d = jnp.pad(x2d, ((0, M_pad - M), (0, 0)))
    grid = (M_pad // TM,)

    d1, d2, d3 = w1.shape[1], w2.shape[1], w3.shape[1]   # 256, 128, 1
    flops = 2 * M_pad * (K * d1 + d1 * d2 + d2 * d3)
    bytes_accessed = 4 * (M_pad * K + M_pad * d3
                          + K * d1 + d1 + d1 * d2 + d2 + d2 * d3 + d3)

    out2d = pl.pallas_call(
        discriminator_kernel,
        out_shape=jax.ShapeDtypeStruct((M_pad, 1), jnp.float32),
        grid=grid,
        in_specs=[
            # x: tiled over M -> auto double-buffered pipeline.
            pl.BlockSpec((TM, K), lambda i: (i, 0)),
            # Weights/biases: constant block index -> loaded once, VMEM-resident.
            pl.BlockSpec((K, d1), lambda i: (0, 0)),
            pl.BlockSpec((1, d1), lambda i: (0, 0)),
            pl.BlockSpec((d1, d2), lambda i: (0, 0)),
            pl.BlockSpec((1, d2), lambda i: (0, 0)),
            pl.BlockSpec((1, d2), lambda i: (0, 0)),          # w3 as a (1,128) row
            pl.BlockSpec(memory_space=pltpu.MemorySpace.SMEM),  # b3 scalar
        ],
        out_specs=pl.BlockSpec((TM, 1), lambda i: (i, 0)),
        compiler_params=pltpu.CompilerParams(
            dimension_semantics=("parallel",)),
        cost_estimate=pl.CostEstimate(flops=flops, transcendentals=0,
                                      bytes_accessed=bytes_accessed),
    )(x2d, w1, b1.reshape(1, -1), w2, b2.reshape(1, -1),
      w3.reshape(1, -1), b3.reshape(1, 1))

    return out2d[:M].reshape(B, C, 1)


def init_params(key):
    """Deterministic init matching nn.Linear shapes (stored as (in, out))."""
    ks = jax.random.split(key, 6)

    def linear(kw, kb, fan_in, fan_out):
        bound = 1.0 / jnp.sqrt(jnp.float32(fan_in))
        w = jax.random.uniform(kw, (fan_in, fan_out), jnp.float32, -bound, bound)
        b = jax.random.uniform(kb, (fan_out,), jnp.float32, -bound, bound)
        return w, b

    w1, b1 = linear(ks[0], ks[1], 784, 256)
    w2, b2 = linear(ks[2], ks[3], 256, 128)
    w3, b3 = linear(ks[4], ks[5], 128, 1)
    return (w1, b1, w2, b2, w3, b3)


def reference_forward(x_nchw, params):
    """Pure-JAX reference for correctness check."""
    w1, b1, w2, b2, w3, b3 = params
    B, C, H, W = x_nchw.shape
    x = x_nchw.reshape(B, C, H * W)
    h1 = jnp.maximum(x @ w1 + b1, 0.0)
    h2 = jnp.maximum(h1 @ w2 + b2, 0.0)
    return h2 @ w3 + b3


if __name__ == "__main__":
    key = jax.random.PRNGKey(0)
    k_x, k_x2, k_p = jax.random.split(key, 3)

    params = init_params(k_p)

    # Spatial must be 28x28 to match the fixed Linear(784, 256).
    B, C, H, W = 2, 4, 28, 28
    x = jax.random.normal(k_x, (B, C, H, W), dtype=jnp.float32)
    out = jax.block_until_ready(discriminator_forward(x, params))
    ref = reference_forward(x, params)
    assert out.shape == (B, C, 1), out.shape
    assert jnp.allclose(out, ref, atol=1e-4, rtol=1e-4), "mismatch vs reference"

    # Second case: M=15 not a multiple of the tile -> exercises padding and a
    # multi-step (pipelined) grid with a small tile.
    B2, C2 = 5, 3
    x2 = jax.random.normal(k_x2, (B2, C2, H, W), dtype=jnp.float32)
    out2 = jax.block_until_ready(discriminator_forward(x2, params, tm=8))
    ref2 = reference_forward(x2, params)
    assert out2.shape == (B2, C2, 1), out2.shape
    assert jnp.allclose(out2, ref2, atol=1e-4, rtol=1e-4), "mismatch (padded tail)"

    print("KERNEL_OK")
</pallas_src>

<mosaic_0001>
module attributes {stable_mosaic.version = 11 : i64} {
  func.func @discriminator_kernel(%arg0: i32, %arg1: memref<8x784xf32, #tpu.memory_space<vmem>>, %arg2: memref<784x256xf32, #tpu.memory_space<vmem>>, %arg3: memref<1x256xf32, #tpu.memory_space<vmem>>, %arg4: memref<256x128xf32, #tpu.memory_space<vmem>>, %arg5: memref<1x128xf32, #tpu.memory_space<vmem>>, %arg6: memref<1x128xf32, #tpu.memory_space<vmem>>, %arg7: memref<1x1xf32, #tpu.memory_space<smem>>, %arg8: memref<8x1xf32, #tpu.memory_space<vmem>>) attributes {dimension_semantics = [#tpu.dimension_semantics<parallel>], iteration_bounds = array<i64: 1>, scalar_prefetch = 0 : i64, scratch_operands = 0 : i64, tpu.core_type = #tpu.core_type<tc>, window_params = [{transform_indices = @transform_0, window_bounds = array<i64: 8, 784>}, {pipeline_mode = #tpu.pipeline_mode<synchronous>, transform_indices = @transform_1, window_bounds = array<i64: 784, 256>}, {pipeline_mode = #tpu.pipeline_mode<synchronous>, transform_indices = @transform_2, window_bounds = array<i64: 1, 256>}, {pipeline_mode = #tpu.pipeline_mode<synchronous>, transform_indices = @transform_3, window_bounds = array<i64: 256, 128>}, {pipeline_mode = #tpu.pipeline_mode<synchronous>, transform_indices = @transform_4, window_bounds = array<i64: 1, 128>}, {pipeline_mode = #tpu.pipeline_mode<synchronous>, transform_indices = @transform_5, window_bounds = array<i64: 1, 128>}, {transform_indices = @transform_6, window_bounds = array<i64: 1, 1>}, {transform_indices = @transform_7, window_bounds = array<i64: 8, 1>}]} {
    %c0 = arith.constant 0 : index
    %c0_0 = arith.constant 0 : index
    %0 = vector.load %arg1[%c0, %c0_0] : memref<8x784xf32, #tpu.memory_space<vmem>>, vector<8x784xf32>
    %c0_1 = arith.constant 0 : index
    %c0_2 = arith.constant 0 : index
    %1 = vector.load %arg2[%c0_1, %c0_2] : memref<784x256xf32, #tpu.memory_space<vmem>>, vector<784x256xf32>
    %cst = arith.constant dense<0.000000e+00> : vector<8x256xf32>
    %2 = tpu.matmul %0, %1, %cst {dimension_numbers = #tpu.dot_dimension_numbers<[1], [0], [0], [1], [0, 0, 1, 1], [], []>} : vector<8x784xf32>, vector<784x256xf32>, vector<8x256xf32> -> vector<8x256xf32>
    %c0_3 = arith.constant 0 : index
    %c0_4 = arith.constant 0 : index
    %3 = vector.load %arg3[%c0_3, %c0_4] : memref<1x256xf32, #tpu.memory_space<vmem>>, vector<1x256xf32>
    %4 = vector.broadcast %3 : vector<1x256xf32> to vector<8x256xf32>
    %5 = arith.addf %2, %4 : vector<8x256xf32>
    %cst_5 = arith.constant 0.000000e+00 : f32
    %6 = vector.broadcast %cst_5 : f32 to vector<8x256xf32>
    %7 = arith.maximumf %5, %6 : vector<8x256xf32>
    %c0_6 = arith.constant 0 : index
    %c0_7 = arith.constant 0 : index
    %8 = vector.load %arg4[%c0_6, %c0_7] : memref<256x128xf32, #tpu.memory_space<vmem>>, vector<256x128xf32>
    %cst_8 = arith.constant dense<0.000000e+00> : vector<8x128xf32>
    %9 = tpu.matmul %7, %8, %cst_8 {dimension_numbers = #tpu.dot_dimension_numbers<[1], [0], [0], [1], [0, 0, 1, 1], [], []>} : vector<8x256xf32>, vector<256x128xf32>, vector<8x128xf32> -> vector<8x128xf32>
    %c0_9 = arith.constant 0 : index
    %c0_10 = arith.constant 0 : index
    %10 = vector.load %arg5[%c0_9, %c0_10] : memref<1x128xf32, #tpu.memory_space<vmem>>, vector<1x128xf32>
    %11 = vector.broadcast %10 : vector<1x128xf32> to vector<8x128xf32>
    %12 = arith.addf %9, %11 : vector<8x128xf32>
    %cst_11 = arith.constant 0.000000e+00 : f32
    %13 = vector.broadcast %cst_11 : f32 to vector<8x128xf32>
    %14 = arith.maximumf %12, %13 : vector<8x128xf32>
    %c0_12 = arith.constant 0 : index
    %c0_13 = arith.constant 0 : index
    %15 = vector.load %arg6[%c0_12, %c0_13] : memref<1x128xf32, #tpu.memory_space<vmem>>, vector<1x128xf32>
    %16 = vector.broadcast %15 : vector<1x128xf32> to vector<8x128xf32>
    %17 = arith.mulf %14, %16 : vector<8x128xf32>
    %cst_14 = arith.constant dense<0.000000e+00> : vector<8xf32>
    %18 = vector.multi_reduction <add>, %17, %cst_14 [1] : vector<8x128xf32> to vector<8xf32>
    %19 = vector.shape_cast %18 : vector<8xf32> to vector<8x1xf32>
    %c0_15 = arith.constant 0 : index
    %c0_16 = arith.constant 0 : index
    %20 = memref.load %arg7[%c0_15, %c0_16] : memref<1x1xf32, #tpu.memory_space<smem>>
    %21 = vector.broadcast %20 : f32 to vector<8x1xf32>
    %22 = arith.addf %19, %21 : vector<8x1xf32>
    %c0_17 = arith.constant 0 : index
    %c0_18 = arith.constant 0 : index
    %23 = vector.load %arg8[%c0_17, %c0_18] : memref<8x1xf32, #tpu.memory_space<vmem>>, vector<8x1xf32>
    tpu.vector_store %arg8[%c0_17, %c0_18], %22 {strides = array<i32>} : memref<8x1xf32, #tpu.memory_space<vmem>>, vector<8x1xf32>,
    return
  }
  func.func @transform_0(%arg0: i32) -> (i32, i32) {
    %c0_i32 = arith.constant 0 : i32
    %c0_i32_0 = arith.constant 0 : i32
    return %arg0, %c0_i32 : i32, i32
  }
  func.func @transform_1(%arg0: i32) -> (i32, i32) {
    %c0_i32 = arith.constant 0 : i32
    %c0_i32_0 = arith.constant 0 : i32
    %c0_i32_1 = arith.constant 0 : i32
    return %c0_i32, %c0_i32_0 : i32, i32
  }
  func.func @transform_2(%arg0: i32) -> (i32, i32) {
    %c0_i32 = arith.constant 0 : i32
    %c0_i32_0 = arith.constant 0 : i32
    %c0_i32_1 = arith.constant 0 : i32
    return %c0_i32, %c0_i32_0 : i32, i32
  }
  func.func @transform_3(%arg0: i32) -> (i32, i32) {
    %c0_i32 = arith.constant 0 : i32
    %c0_i32_0 = arith.constant 0 : i32
    %c0_i32_1 = arith.constant 0 : i32
    return %c0_i32, %c0_i32_0 : i32, i32
  }
  func.func @transform_4(%arg0: i32) -> (i32, i32) {
    %c0_i32 = arith.constant 0 : i32
    %c0_i32_0 = arith.constant 0 : i32
    %c0_i32_1 = arith.constant 0 : i32
    return %c0_i32, %c0_i32_0 : i32, i32
  }
  func.func @transform_5(%arg0: i32) -> (i32, i32) {
    %c0_i32 = arith.constant 0 : i32
    %c0_i32_0 = arith.constant 0 : i32
    %c0_i32_1 = arith.constant 0 : i32
    return %c0_i32, %c0_i32_0 : i32, i32
  }
  func.func @transform_6(%arg0: i32) -> (i32, i32) {
    %c0_i32 = arith.constant 0 : i32
    %c0_i32_0 = arith.constant 0 : i32
    %c0_i32_1 = arith.constant 0 : i32
    return %c0_i32, %c0_i32_0 : i32, i32
  }
  func.func @transform_7(%arg0: i32) -> (i32, i32) {
    %c0_i32 = arith.constant 0 : i32
    %c0_i32_0 = arith.constant 0 : i32
    return %arg0, %c0_i32 : i32, i32
  }
}

</mosaic_0001>

<llo_original>
// kernel: tpu_custom_call.1
$region0: #{tpu_custom_call.1}
  #allocation0 [shape = 'u32[]', space=smem, size = 0x4, offset = 0x4, fixed_abs, tag = 'smem constant byte address 0x4 - core index']
  #allocation1 [shape = 'u32[72,128]{1,0:T(1,128)}', space=vmem, size = 0x9000, scoped, tag = 'internal scratch']
  #allocation2 [shape = 'f32[1,1]{1,0:T(1,128)S(6)}', space=smem, size = 0x200, scoped, tag = 'scoped memory for tpu_custom_call.1']
  %s0 = inlined_call_operand.hbm [shape: f32[8,784], index: 0, kind: input, shape index: {}]
  %s1 = inlined_call_operand.hbm [shape: f32[784,256], index: 1, kind: input, shape index: {}]
  %s2 = inlined_call_operand.vmem [shape: f32[1,256], index: 2, kind: input, shape index: {}]
  %s3 = inlined_call_operand.hbm [shape: f32[256,128], index: 3, kind: input, shape index: {}]
  %s4 = inlined_call_operand.vmem [shape: f32[1,128], index: 4, kind: input, shape index: {}]
  %s5 = inlined_call_operand.vmem [shape: f32[1,128], index: 5, kind: input, shape index: {}]
  %s6 = inlined_call_operand.<no memory space> [shape: f32[1,1], index: 6, kind: input, shape index: {}]
  %s7 = inlined_call_operand.vmem [shape: f32[8,1], index: 7, kind: output, shape index: {}]
  %s8 = sld [smem:[#allocation0]]
  $region50: #{tpu_custom_call.1} parent=0
    _
  %s10 = ssub.s32 1, %s8
  %s11 = scalar_select 0, %s10, %s8
  %12 = sst [smem:[#allocation2]] %s6
  $region1: #{tpu_custom_call.1} parent=0
    #allocation3 [shape = 'u8[28672]{0}', space=vmem, size = 0x7000, scoped, tag = 'input window, operand 0, single buffered']
    #allocation4 [shape = 's32[1]{0}', space=sflag, size = 0x4, scoped, tag = 'scoped memory for tpu_custom_call.1']
    #allocation5 [shape = 'u8[802816]{0}', space=vmem, size = 0xc4000, scoped, tag = 'input window, operand 1, single buffered']
    #allocation6 [shape = 's32[1]{0}', space=sflag, size = 0x4, scoped, tag = 'scoped memory for tpu_custom_call.1']
    #allocation7 [shape = 'u8[131072]{0}', space=vmem, size = 0x20000, scoped, tag = 'input window, operand 3, single buffered']
    %13 = vsyncpa [#allocation4], 0
    %14 = vsyncpa [#allocation6], 0
    // Predicated region
    $region2: #{tpu_custom_call.1} parent=1 // pred_check
      _
    $region3: #{tpu_custom_call.1} parent=1 // pred_check_branch
      %16 = sbr.rel (0) target = $region5
    $region4: #{tpu_custom_call.1} parent=1 // pred_region
      %18 = vsyncadd [#allocation4], 0
      %s20 = sshll.u32 %s0, 4
      %s21 = int_to_ptr.hbm [resolvable:$true] %s20
      %s22 = sshll.u32 [#allocation3], 4
      %s23 = int_to_ptr.vmem [resolvable:$true] %s22
      %25 = dma.hbm_to_vmem [thread:$0]  %s21, 896, %s23, [#allocation4]
    $region5: #{tpu_custom_call.1} parent=1 // pred_fallthru
      _
    // Predicated region
    $region6: #{tpu_custom_call.1} parent=1 // pred_check
      _
    $region7: #{tpu_custom_call.1} parent=1 // pred_check_branch
      %27 = sbr.rel (0) target = $region9
    $region8: #{tpu_custom_call.1} parent=1 // pred_region
      %29 = vsyncadd [#allocation6], 0
      %s30 = sshll.u32 %s1, 4
      %s31 = int_to_ptr.hbm [resolvable:$true] %s30
      %s32 = sshll.u32 [#allocation5], 4
      %s33 = int_to_ptr.vmem [resolvable:$true] %s32
      %38 = dma.hbm_to_vmem [thread:$0]  %s31, 25088, %s33, [#allocation6], 256, 256, 16
    $region9: #{tpu_custom_call.1} parent=1 // pred_fallthru
      _
    // Predicated region
    $region10: #{tpu_custom_call.1} parent=1 // pred_check
      _
    $region11: #{tpu_custom_call.1} parent=1 // pred_check_branch
      %40 = sbr.rel (0) target = $region13
    $region12: #{tpu_custom_call.1} parent=1 // pred_region
      _
    $region13: #{tpu_custom_call.1} parent=1 // pred_fallthru
      _
    // Predicated region
    $region14: #{tpu_custom_call.1} parent=1 // pred_check
      _
    $region15: #{tpu_custom_call.1} parent=1 // pred_check_branch
      %42 = sbr.rel (0) target = $region17
    $region16: #{tpu_custom_call.1} parent=1 // pred_region
      %44 = vsyncadd [#allocation6], 0
      %s45 = sshll.u32 %s3, 4
      %s46 = int_to_ptr.hbm [resolvable:$true] %s45
      %s47 = sshll.u32 [#allocation7], 4
      %s48 = int_to_ptr.vmem [resolvable:$true] %s47
      %53 = dma.hbm_to_vmem [thread:$0]  %s46, 4096, %s48, [#allocation6], 128, 128, 8
    $region17: #{tpu_custom_call.1} parent=1 // pred_fallthru
      _
    // Predicated region
    $region18: #{tpu_custom_call.1} parent=1 // pred_check
      _
    $region19: #{tpu_custom_call.1} parent=1 // pred_check_branch
      %55 = sbr.rel (0) target = $region21
    $region20: #{tpu_custom_call.1} parent=1 // pred_region
      _
    $region21: #{tpu_custom_call.1} parent=1 // pred_fallthru
      _
    // Predicated region
    $region22: #{tpu_custom_call.1} parent=1 // pred_check
      _
    $region23: #{tpu_custom_call.1} parent=1 // pred_check_branch
      %57 = sbr.rel (0) target = $region25
    $region24: #{tpu_custom_call.1} parent=1 // pred_region
      _
    $region25: #{tpu_custom_call.1} parent=1 // pred_fallthru
      _
    // Predicated region
    $region26: #{tpu_custom_call.1} parent=1 // pred_check
      _
    $region27: #{tpu_custom_call.1} parent=1 // pred_check_branch
      %59 = sbr.rel (0) target = $region29
    $region28: #{tpu_custom_call.1} parent=1 // pred_region
      _
    $region29: #{tpu_custom_call.1} parent=1 // pred_fallthru
      _
    // Predicated region
    $region30: #{tpu_custom_call.1} parent=1 // pred_check
      _
    $region31: #{tpu_custom_call.1} parent=1 // pred_check_branch
      %61 = sbr.rel (0) target = $region33
    $region32: #{tpu_custom_call.1} parent=1 // pred_region
      %63 = dma.done [#allocation4], 896
    $region33: #{tpu_custom_call.1} parent=1 // pred_fallthru
      _
    // Predicated region
    $region34: #{tpu_custom_call.1} parent=1 // pred_check
      _
    $region35: #{tpu_custom_call.1} parent=1 // pred_check_branch
      %65 = sbr.rel (0) target = $region37
    $region36: #{tpu_custom_call.1} parent=1 // pred_region
      %67 = dma.done [#allocation6], 25088
    $region37: #{tpu_custom_call.1} parent=1 // pred_fallthru
      _
    // Predicated region
    $region38: #{tpu_custom_call.1} parent=1 // pred_check
      _
    $region39: #{tpu_custom_call.1} parent=1 // pred_check_branch
      %69 = sbr.rel (0) target = $region41
    $region40: #{tpu_custom_call.1} parent=1 // pred_region
      %71 = dma.done [#allocation6], 4096
    $region41: #{tpu_custom_call.1} parent=1 // pred_fallthru
      _
    %v72 = vld [vmem:[#allocation3] sm:$0xff]
    %v73 = vld [vmem:[#allocation3 + $0x8] sm:$0xff]
    %v74 = vld [vmem:[#allocation3 + $0x10] sm:$0xff]
    %v75 = vld [vmem:[#allocation3 + $0x18] sm:$0xff]
    %v76 = vld [vmem:[#allocation3 + $0x20] sm:$0xff]
    %v77 = vld [vmem:[#allocation3 + $0x28] sm:$0xff]
    %v78 = vld [vmem:[#allocation3 + $0x30] sm:$0xff]
    %v79 = vld [vmem:[#allocation5] sm:$0xff]
    %v80 = vld [vmem:[#allocation5 + $0x8] sm:$0xff]
    %v81 = vld [vmem:[#allocation5 + $0x10] sm:$0xff]
    %v82 = vld [vmem:[#allocation5 + $0x18] sm:$0xff]
    %v83 = vld [vmem:[#allocation5 + $0x20] sm:$0xff]
    %v84 = vld [vmem:[#allocation5 + $0x28] sm:$0xff]
    %v85 = vld [vmem:[#allocation5 + $0x30] sm:$0xff]
    %v86 = vld [vmem:[#allocation5 + $0x38] sm:$0xff]
    %v87 = vld [vmem:[#allocation5 + $0x40] sm:$0xff]
    %v88 = vld [vmem:[#allocation5 + $0x48] sm:$0xff]
    %v89 = vld [vmem:[#allocation5 + $0x50] sm:$0xff]
    %v90 = vld [vmem:[#allocation5 + $0x58] sm:$0xff]
    %v91 = vld [vmem:[#allocation5 + $0x60] sm:$0xff]
    %v92 = vld [vmem:[#allocation5 + $0x68] sm:$0xff]
    %v93 = vld [vmem:[#allocation5 + $0x70] sm:$0xff]
    %v94 = vld [vmem:[#allocation5 + $0x78] sm:$0xff]
    %v95 = vld [vmem:[#allocation5 + $0x80] sm:$0xff]
    %v96 = vld [vmem:[#allocation5 + $0x88] sm:$0xff]
    %v97 = vld [vmem:[#allocation5 + $0x90] sm:$0xff]
    %v98 = vld [vmem:[#allocation5 + $0x98] sm:$0xff]
    %v99 = vld [vmem:[#allocation5 + $0xa0] sm:$0xff]
    %v100 = vld [vmem:[#allocation5 + $0xa8] sm:$0xff]
    %v101 = vld [vmem:[#allocation5 + $0xb0] sm:$0xff]
    %v102 = vld [vmem:[#allocation5 + $0xb8] sm:$0xff]
    %v103 = vld [vmem:[#allocation5 + $0xc0] sm:$0xff]
    %v104 = vld [vmem:[#allocation5 + $0xc8] sm:$0xff]
    %v105 = vld [vmem:[#allocation5 + $0xd0] sm:$0xff]
    %v106 = vld [vmem:[#allocation5 + $0xd8] sm:$0xff]
    %v107 = vld [vmem:[#allocation5 + $0xe0] sm:$0xff]
    %v108 = vld [vmem:[#allocation5 + $0xe8] sm:$0xff]
    %v109 = vld [vmem:[#allocation5 + $0xf0] sm:$0xff]
    %v110 = vld [vmem:[#allocation5 + $0xf8] sm:$0xff]
    %v111 = vld [vmem:[#allocation5 + $0x100] sm:$0xff]
    %v112 = vld [vmem:[#allocation5 + $0x108] sm:$0xff]
    %v113 = vld [vmem:[#allocation5 + $0x110] sm:$0xff]
    %v114 = vld [vmem:[#allocation5 + $0x118] sm:$0xff]
    %v115 = vld [vmem:[#allocation5 + $0x120] sm:$0xff]
    %v116 = vld [vmem:[#allocation5 + $0x128] sm:$0xff]
    %v117 = vld [vmem:[#allocation5 + $0x130] sm:$0xff]
    %v118 = vld [vmem:[#allocation5 + $0x138] sm:$0xff]
    %v119 = vld [vmem:[#allocation5 + $0x140] sm:$0xff]
    %v120 = vld [vmem:[#allocation5 + $0x148] sm:$0xff]
    %v121 = vld [vmem:[#allocation5 + $0x150] sm:$0xff]
    %v122 = vld [vmem:[#allocation5 + $0x158] sm:$0xff]
    %v123 = vld [vmem:[#allocation5 + $0x160] sm:$0xff]
    %v124 = vld [vmem:[#allocation5 + $0x168] sm:$0xff]
    %v125 = vld [vmem:[#allocation5 + $0x170] sm:$0xff]
    %v126 = vld [vmem:[#allocation5 + $0x178] sm:$0xff]
    %v127 = vld [vmem:[#allocation5 + $0x180] sm:$0xff]
    %v128 = vld [vmem:[#allocation5 + $0x188] sm:$0xff]
    %v129 = vld [vmem:[#allocation5 + $0x190] sm:$0xff]
    %v130 = vld [vmem:[#allocation5 + $0x198] sm:$0xff]
    %v131 = vld [vmem:[#allocation5 + $0x1a0] sm:$0xff]
    %v132 = vld [vmem:[#allocation5 + $0x1a8] sm:$0xff]
    %v133 = vld [vmem:[#allocation5 + $0x1b0] sm:$0xff]
    %v134 = vld [vmem:[#allocation5 + $0x1b8] sm:$0xff]
    %v135 = vld [vmem:[#allocation5 + $0x1c0] sm:$0xff]
    %v136 = vld [vmem:[#allocation5 + $0x1c8] sm:$0xff]
    %v137 = vld [vmem:[#allocation5 + $0x1d0] sm:$0xff]
    %v138 = vld [vmem:[#allocation5 + $0x1d8] sm:$0xff]
    %v139 = vld [vmem:[#allocation5 + $0x1e0] sm:$0xff]
    %v140 = vld [vmem:[#allocation5 + $0x1e8] sm:$0xff]
    %v141 = vld [vmem:[#allocation5 + $0x1f0] sm:$0xff]
    %v142 = vld [vmem:[#allocation5 + $0x1f8] sm:$0xff]
    %v143 = vld [vmem:[#allocation5 + $0x200] sm:$0xff]
    %v144 = vld [vmem:[#allocation5 + $0x208] sm:$0xff]
    %v145 = vld [vmem:[#allocation5 + $0x210] sm:$0xff]
    %v146 = vld [vmem:[#allocation5 + $0x218] sm:$0xff]
    %v147 = vld [vmem:[#allocation5 + $0x220] sm:$0xff]
    %v148 = vld [vmem:[#allocation5 + $0x228] sm:$0xff]
    %v149 = vld [vmem:[#allocation5 + $0x230] sm:$0xff]
    %v150 = vld [vmem:[#allocation5 + $0x238] sm:$0xff]
    %v151 = vld [vmem:[#allocation5 + $0x240] sm:$0xff]
    %v152 = vld [vmem:[#allocation5 + $0x248] sm:$0xff]
    %v153 = vld [vmem:[#allocation5 + $0x250] sm:$0xff]
    %v154 = vld [vmem:[#allocation5 + $0x258] sm:$0xff]
    %v155 = vld [vmem:[#allocation5 + $0x260] sm:$0xff]
    %v156 = vld [vmem:[#allocation5 + $0x268] sm:$0xff]
    %v157 = vld [vmem:[#allocation5 + $0x270] sm:$0xff]
    %v158 = vld [vmem:[#allocation5 + $0x278] sm:$0xff]
    %v159 = vld [vmem:[#allocation5 + $0x280] sm:$0xff]
    %v160 = vld [vmem:[#allocation5 + $0x288] sm:$0xff]
    %v161 = vld [vmem:[#allocation5 + $0x290] sm:$0xff]
    %v162 = vld [vmem:[#allocation5 + $0x298] sm:$0xff]
    %v163 = vld [vmem:[#allocation5 + $0x2a0] sm:$0xff]
    %v164 = vld [vmem:[#allocation5 + $0x2a8] sm:$0xff]
    %v165 = vld [vmem:[#allocation5 + $0x2b0] sm:$0xff]
    %v166 = vld [vmem:[#allocation5 + $0x2b8] sm:$0xff]
    %v167 = vld [vmem:[#allocation5 + $0x2c0] sm:$0xff]
    %v168 = vld [vmem:[#allocation5 + $0x2c8] sm:$0xff]
    %v169 = vld [vmem:[#allocation5 + $0x2d0] sm:$0xff]
    %v170 = vld [vmem:[#allocation5 + $0x2d8] sm:$0xff]
    %v171 = vld [vmem:[#allocation5 + $0x2e0] sm:$0xff]
    %v172 = vld [vmem:[#allocation5 + $0x2e8] sm:$0xff]
    %v173 = vld [vmem:[#allocation5 + $0x2f0] sm:$0xff]
    %v174 = vld [vmem:[#allocation5 + $0x2f8] sm:$0xff]
    %v175 = vld [vmem:[#allocation5 + $0x300] sm:$0xff]
    %v176 = vld [vmem:[#allocation5 + $0x308] sm:$0xff]
    %v177 = vld [vmem:[#allocation5 + $0x310] sm:$0xff]
    %v178 = vld [vmem:[#allocation5 + $0x318] sm:$0xff]
    %v179 = vld [vmem:[#allocation5 + $0x320] sm:$0xff]
    %v180 = vld [vmem:[#allocation5 + $0x328] sm:$0xff]
    %v181 = vld [vmem:[#allocation5 + $0x330] sm:$0xff]
    %v182 = vld [vmem:[#allocation5 + $0x338] sm:$0xff]
    %v183 = vld [vmem:[#allocation5 + $0x340] sm:$0xff]
    %v184 = vld [vmem:[#allocation5 + $0x348] sm:$0xff]
    %v185 = vld [vmem:[#allocation5 + $0x350] sm:$0xff]
    %v186 = vld [vmem:[#allocation5 + $0x358] sm:$0xff]
    %v187 = vld [vmem:[#allocation5 + $0x360] sm:$0xff]
    %v188 = vld [vmem:[#allocation5 + $0x368] sm:$0xff]
    %v189 = vld [vmem:[#allocation5 + $0x370] sm:$0xff]
    %v190 = vld [vmem:[#allocation5 + $0x378] sm:$0xff]
    %v191 = vld [vmem:[#allocation5 + $0x380] sm:$0xff]
    %v192 = vld [vmem:[#allocation5 + $0x388] sm:$0xff]
    %v193 = vld [vmem:[#allocation5 + $0x390] sm:$0xff]
    %v194 = vld [vmem:[#allocation5 + $0x398] sm:$0xff]
    %v195 = vld [vmem:[#allocation5 + $0x3a0] sm:$0xff]
    %v196 = vld [vmem:[#allocation5 + $0x3a8] sm:$0xff]
    %v197 = vld [vmem:[#allocation5 + $0x3b0] sm:$0xff]
    %v198 = vld [vmem:[#allocation5 + $0x3b8] sm:$0xff]
    %v199 = vld [vmem:[#allocation5 + $0x3c0] sm:$0xff]
    %v200 = vld [vmem:[#allocation5 + $0x3c8] sm:$0xff]
    %v201 = vld [vmem:[#allocation5 + $0x3d0] sm:$0xff]
    %v202 = vld [vmem:[#allocation5 + $0x3d8] sm:$0xff]
    %v203 = vld [vmem:[#allocation5 + $0x3e0] sm:$0xff]
    %v204 = vld [vmem:[#allocation5 + $0x3e8] sm:$0xff]
    %v205 = vld [vmem:[#allocation5 + $0x3f0] sm:$0xff]
    %v206 = vld [vmem:[#allocation5 + $0x3f8] sm:$0xff]
    %v207 = vld [vmem:[#allocation5 + $0x400] sm:$0xff]
    %v208 = vld [vmem:[#allocation5 + $0x408] sm:$0xff]
    %v209 = vld [vmem:[#allocation5 + $0x410] sm:$0xff]
    %v210 = vld [vmem:[#allocation5 + $0x418] sm:$0xff]
    %v211 = vld [vmem:[#allocation5 + $0x420] sm:$0xff]
    %v212 = vld [vmem:[#allocation5 + $0x428] sm:$0xff]
    %v213 = vld [vmem:[#allocation5 + $0x430] sm:$0xff]
    %v214 = vld [vmem:[#allocation5 + $0x438] sm:$0xff]
    %v215 = vld [vmem:[#allocation5 + $0x440] sm:$0xff]
    %v216 = vld [vmem:[#allocation5 + $0x448] sm:$0xff]
    %v217 = vld [vmem:[#allocation5 + $0x450] sm:$0xff]
    %v218 = vld [vmem:[#allocation5 + $0x458] sm:$0xff]
    %v219 = vld [vmem:[#allocation5 + $0x460] sm:$0xff]
    %v220 = vld [vmem:[#allocation5 + $0x468] sm:$0xff]
    %v221 = vld [vmem:[#allocation5 + $0x470] sm:$0xff]
    %v222 = vld [vmem:[#allocation5 + $0x478] sm:$0xff]
    %v223 = vld [vmem:[#allocation5 + $0x480] sm:$0xff]
    %v224 = vld [vmem:[#allocation5 + $0x488] sm:$0xff]
    %v225 = vld [vmem:[#allocation5 + $0x490] sm:$0xff]
    %v226 = vld [vmem:[#allocation5 + $0x498] sm:$0xff]
    %v227 = vld [vmem:[#allocation5 + $0x4a0] sm:$0xff]
    %v228 = vld [vmem:[#allocation5 + $0x4a8] sm:$0xff]
    %v229 = vld [vmem:[#allocation5 + $0x4b0] sm:$0xff]
    %v230 = vld [vmem:[#allocation5 + $0x4b8] sm:$0xff]
    %v231 = vld [vmem:[#allocation5 + $0x4c0] sm:$0xff]
    %v232 = vld [vmem:[#allocation5 + $0x4c8] sm:$0xff]
    %v233 = vld [vmem:[#allocation5 + $0x4d0] sm:$0xff]
    %v234 = vld [vmem:[#allocation5 + $0x4d8] sm:$0xff]
    %v235 = vld [vmem:[#allocation5 + $0x4e0] sm:$0xff]
    %v236 = vld [vmem:[#allocation5 + $0x4e8] sm:$0xff]
    %v237 = vld [vmem:[#allocation5 + $0x4f0] sm:$0xff]
    %v238 = vld [vmem:[#allocation5 + $0x4f8] sm:$0xff]
    %v239 = vld [vmem:[#allocation5 + $0x500] sm:$0xff]
    %v240 = vld [vmem:[#allocation5 + $0x508] sm:$0xff]
    %v241 = vld [vmem:[#allocation5 + $0x510] sm:$0xff]
    %v242 = vld [vmem:[#allocation5 + $0x518] sm:$0xff]
    %v243 = vld [vmem:[#allocation5 + $0x520] sm:$0xff]
    %v244 = vld [vmem:[#allocation5 + $0x528] sm:$0xff]
    %v245 = vld [vmem:[#allocation5 + $0x530] sm:$0xff]
    %v246 = vld [vmem:[#allocation5 + $0x538] sm:$0xff]
    %v247 = vld [vmem:[#allocation5 + $0x540] sm:$0xff]
    %v248 = vld [vmem:[#allocation5 + $0x548] sm:$0xff]
    %v249 = vld [vmem:[#allocation5 + $0x550] sm:$0xff]
    %v250 = vld [vmem:[#allocation5 + $0x558] sm:$0xff]
    %v251 = vld [vmem:[#allocation5 + $0x560] sm:$0xff]
    %v252 = vld [vmem:[#allocation5 + $0x568] sm:$0xff]
    %v253 = vld [vmem:[#allocation5 + $0x570] sm:$0xff]
    %v254 = vld [vmem:[#allocation5 + $0x578] sm:$0xff]
    %v255 = vld [vmem:[#allocation5 + $0x580] sm:$0xff]
    %v256 = vld [vmem:[#allocation5 + $0x588] sm:$0xff]
    %v257 = vld [vmem:[#allocation5 + $0x590] sm:$0xff]
    %v258 = vld [vmem:[#allocation5 + $0x598] sm:$0xff]
    %v259 = vld [vmem:[#allocation5 + $0x5a0] sm:$0xff]
    %v260 = vld [vmem:[#allocation5 + $0x5a8] sm:$0xff]
    %v261 = vld [vmem:[#allocation5 + $0x5b0] sm:$0xff]
    %v262 = vld [vmem:[#allocation5 + $0x5b8] sm:$0xff]
    %v263 = vld [vmem:[#allocation5 + $0x5c0] sm:$0xff]
    %v264 = vld [vmem:[#allocation5 + $0x5c8] sm:$0xff]
    %v265 = vld [vmem:[#allocation5 + $0x5d0] sm:$0xff]
    %v266 = vld [vmem:[#allocation5 + $0x5d8] sm:$0xff]
    %v267 = vld [vmem:[#allocation5 + $0x5e0] sm:$0xff]
    %v268 = vld [vmem:[#allocation5 + $0x5e8] sm:$0xff]
    %v269 = vld [vmem:[#allocation5 + $0x5f0] sm:$0xff]
    %v270 = vld [vmem:[#allocation5 + $0x5f8] sm:$0xff]
    %v271 = vld [vmem:[#allocation5 + $0x600] sm:$0xff]
    %v272 = vld [vmem:[#allocation5 + $0x608] sm:$0xff]
    %v273 = vld [vmem:[#allocation5 + $0x610] sm:$0xff]
    %v274 = vld [vmem:[#allocation5 + $0x618] sm:$0xff]
    %v275 = vld [vmem:[%s2] sm:$0x3]
    %v277 = vperm.slane %v275, 0
    %v278 = vperm.slane %v275, 1
    %vm281 = vcmask 130048
    %v283 = vsel %vm281, %v78, 0
    %285 = vmatpush.msra.mxu0 %v109
    %286 = vmatpush.msra.mxu0 %v107
    %287 = vmatpush.msra.mxu0 %v105
    %288 = vmatpush.msra.mxu0 %v103
    %289 = vmatpush.msra.mxu0 %v101
    %290 = vmatpush.msra.mxu0 %v99
    %291 = vmatpush.msra.mxu0 %v97
    %292 = vmatpush.msra.mxu0 %v95
    %293 = vmatpush.msra.mxu0 %v93
    %294 = vmatpush.msra.mxu0 %v91
    %295 = vmatpush.msra.mxu0 %v89
    %296 = vmatpush.msra.mxu0 %v87
    %297 = vmatpush.msra.mxu0 %v85
    %298 = vmatpush.msra.mxu0 %v83
    %299 = vmatpush.msra.mxu0 %v81
    %300 = vmatpush.msra.mxu0 %v79
    %301 = vmatmul.f32.gmra.mxu0 %v72
    %v302 = vpop.f32.mrf.mxu0
    %v303 = vadd.f32 %v277, %v302
    %304 = vdwg.mxu0
    %305 = vmatpush.msra.mxu0 %v141
    %306 = vmatpush.msra.mxu0 %v139
    %307 = vmatpush.msra.mxu0 %v137
    %308 = vmatpush.msra.mxu0 %v135
    %309 = vmatpush.msra.mxu0 %v133
    %310 = vmatpush.msra.mxu0 %v131
    %311 = vmatpush.msra.mxu0 %v129
    %312 = vmatpush.msra.mxu0 %v127
    %313 = vmatpush.msra.mxu0 %v125
    %314 = vmatpush.msra.mxu0 %v123
    %315 = vmatpush.msra.mxu0 %v121
    %316 = vmatpush.msra.mxu0 %v119
    %317 = vmatpush.msra.mxu0 %v117
    %318 = vmatpush.msra.mxu0 %v115
    %319 = vmatpush.msra.mxu0 %v113
    %320 = vmatpush.msra.mxu0 %v111
    %321 = vmatmul.f32.gmra.mxu0 %v73
    %v322 = vpop.f32.mrf.mxu0
    %v323 = vadd.f32 %v303, %v322
    %324 = vdwg.mxu0
    %325 = vmatpush.msra.mxu0 %v173
    %326 = vmatpush.msra.mxu0 %v171
    %327 = vmatpush.msra.mxu0 %v169
    %328 = vmatpush.msra.mxu0 %v167
    %329 = vmatpush.msra.mxu0 %v165
    %330 = vmatpush.msra.mxu0 %v163
    %331 = vmatpush.msra.mxu0 %v161
    %332 = vmatpush.msra.mxu0 %v159
    %333 = vmatpush.msra.mxu0 %v157
    %334 = vmatpush.msra.mxu0 %v155
    %335 = vmatpush.msra.mxu0 %v153
    %336 = vmatpush.msra.mxu0 %v151
    %337 = vmatpush.msra.mxu0 %v149
    %338 = vmatpush.msra.mxu0 %v147
    %339 = vmatpush.msra.mxu0 %v145
    %340 = vmatpush.msra.mxu0 %v143
    %341 = vmatmul.f32.gmra.mxu0 %v74
    %v342 = vpop.f32.mrf.mxu0
    %v343 = vadd.f32 %v323, %v342
    %344 = vdwg.mxu0
    %345 = vmatpush.msra.mxu0 %v205
    %346 = vmatpush.msra.mxu0 %v203
    %347 = vmatpush.msra.mxu0 %v201
    %348 = vmatpush.msra.mxu0 %v199
    %349 = vmatpush.msra.mxu0 %v197
    %350 = vmatpush.msra.mxu0 %v195
    %351 = vmatpush.msra.mxu0 %v193
    %352 = vmatpush.msra.mxu0 %v191
    %353 = vmatpush.msra.mxu0 %v189
    %354 = vmatpush.msra.mxu0 %v187
    %355 = vmatpush.msra.mxu0 %v185
    %356 = vmatpush.msra.mxu0 %v183
    %357 = vmatpush.msra.mxu0 %v181
    %358 = vmatpush.msra.mxu0 %v179
    %359 = vmatpush.msra.mxu0 %v177
    %360 = vmatpush.msra.mxu0 %v175
    %361 = vmatmul.f32.gmra.mxu0 %v75
    %v362 = vpop.f32.mrf.mxu0
    %v363 = vadd.f32 %v343, %v362
    %364 = vdwg.mxu0
    %365 = vmatpush.msra.mxu0 %v237
    %366 = vmatpush.msra.mxu0 %v235
    %367 = vmatpush.msra.mxu0 %v233
    %368 = vmatpush.msra.mxu0 %v231
    %369 = vmatpush.msra.mxu0 %v229
    %370 = vmatpush.msra.mxu0 %v227
    %371 = vmatpush.msra.mxu0 %v225
    %372 = vmatpush.msra.mxu0 %v223
    %373 = vmatpush.msra.mxu0 %v221
    %374 = vmatpush.msra.mxu0 %v219
    %375 = vmatpush.msra.mxu0 %v217
    %376 = vmatpush.msra.mxu0 %v215
    %377 = vmatpush.msra.mxu0 %v213
    %378 = vmatpush.msra.mxu0 %v211
    %379 = vmatpush.msra.mxu0 %v209
    %380 = vmatpush.msra.mxu0 %v207
    %381 = vmatmul.f32.gmra.mxu0 %v76
    %v382 = vpop.f32.mrf.mxu0
    %v383 = vadd.f32 %v363, %v382
    %384 = vdwg.mxu0
    %385 = vmatpush.msra.mxu0 %v269
    %386 = vmatpush.msra.mxu0 %v267
    %387 = vmatpush.msra.mxu0 %v265
    %388 = vmatpush.msra.mxu0 %v263
    %389 = vmatpush.msra.mxu0 %v261
    %390 = vmatpush.msra.mxu0 %v259
    %391 = vmatpush.msra.mxu0 %v257
    %392 = vmatpush.msra.mxu0 %v255
    %393 = vmatpush.msra.mxu0 %v253
    %394 = vmatpush.msra.mxu0 %v251
    %395 = vmatpush.msra.mxu0 %v249
    %396 = vmatpush.msra.mxu0 %v247
    %397 = vmatpush.msra.mxu0 %v245
    %398 = vmatpush.msra.mxu0 %v243
    %399 = vmatpush.msra.mxu0 %v241
    %400 = vmatpush.msra.mxu0 %v239
    %401 = vmatmul.f32.gmra.mxu0 %v77
    %v402 = vpop.f32.mrf.mxu0
    %v403 = vadd.f32 %v383, %v402
    %404 = vdwg.mxu0
    %405 = vmatpush.msra.mxu0 0.0
    %406 = vmatpush.msra.mxu0 0.0
    %407 = vmatpush.msra.mxu0 0.0
    %408 = vmatpush.msra.mxu0 0.0
    %409 = vmatpush.msra.mxu0 0.0
    %410 = vmatpush.msra.mxu0 0.0
    %411 = vmatpush.msra.mxu0 0.0
    %412 = vmatpush.msra.mxu0 0.0
    %413 = vmatpush.msra.mxu0 0.0
    %414 = vmatpush.msra.mxu0 0.0
    %415 = vmatpush.msra.mxu0 0.0
    %416 = vmatpush.msra.mxu0 0.0
    %417 = vmatpush.msra.mxu0 0.0
    %418 = vmatpush.msra.mxu0 0.0
    %419 = vmatpush.msra.mxu0 %v273
    %420 = vmatpush.msra.mxu0 %v271
    %421 = vmatmul.f32.gmra.mxu0 %v283
    %v422 = vpop.f32.mrf.mxu0
    %v423 = vadd.f32 %v403, %v422
    %424 = vdwg.mxu0
    %425 = vmatpush.msra.mxu0 %v110
    %426 = vmatpush.msra.mxu0 %v108
    %427 = vmatpush.msra.mxu0 %v106
    %428 = vmatpush.msra.mxu0 %v104
    %429 = vmatpush.msra.mxu0 %v102
    %430 = vmatpush.msra.mxu0 %v100
    %431 = vmatpush.msra.mxu0 %v98
    %432 = vmatpush.msra.mxu0 %v96
    %433 = vmatpush.msra.mxu0 %v94
    %434 = vmatpush.msra.mxu0 %v92
    %435 = vmatpush.msra.mxu0 %v90
    %436 = vmatpush.msra.mxu0 %v88
    %437 = vmatpush.msra.mxu0 %v86
    %438 = vmatpush.msra.mxu0 %v84
    %439 = vmatpush.msra.mxu0 %v82
    %440 = vmatpush.msra.mxu0 %v80
    %441 = vmatmul.f32.gmra.mxu0 %v72
    %v442 = vpop.f32.mrf.mxu0
    %v443 = vadd.f32 %v278, %v442
    %444 = vdwg.mxu0
    %445 = vmatpush.msra.mxu0 %v142
    %446 = vmatpush.msra.mxu0 %v140
    %447 = vmatpush.msra.mxu0 %v138
    %448 = vmatpush.msra.mxu0 %v136
    %449 = vmatpush.msra.mxu0 %v134
    %450 = vmatpush.msra.mxu0 %v132
    %451 = vmatpush.msra.mxu0 %v130
    %452 = vmatpush.msra.mxu0 %v128
    %453 = vmatpush.msra.mxu0 %v126
    %454 = vmatpush.msra.mxu0 %v124
    %455 = vmatpush.msra.mxu0 %v122
    %456 = vmatpush.msra.mxu0 %v120
    %457 = vmatpush.msra.mxu0 %v118
    %458 = vmatpush.msra.mxu0 %v116
    %459 = vmatpush.msra.mxu0 %v114
    %460 = vmatpush.msra.mxu0 %v112
    %461 = vmatmul.f32.gmra.mxu0 %v73
    %v462 = vpop.f32.mrf.mxu0
    %v463 = vadd.f32 %v443, %v462
    %464 = vdwg.mxu0
    %465 = vmatpush.msra.mxu0 %v174
    %466 = vmatpush.msra.mxu0 %v172
    %467 = vmatpush.msra.mxu0 %v170
    %468 = vmatpush.msra.mxu0 %v168
    %469 = vmatpush.msra.mxu0 %v166
    %470 = vmatpush.msra.mxu0 %v164
    %471 = vmatpush.msra.mxu0 %v162
    %472 = vmatpush.msra.mxu0 %v160
    %473 = vmatpush.msra.mxu0 %v158
    %474 = vmatpush.msra.mxu0 %v156
    %475 = vmatpush.msra.mxu0 %v154
    %476 = vmatpush.msra.mxu0 %v152
    %477 = vmatpush.msra.mxu0 %v150
    %478 = vmatpush.msra.mxu0 %v148
    %479 = vmatpush.msra.mxu0 %v146
    %480 = vmatpush.msra.mxu0 %v144
    %481 = vmatmul.f32.gmra.mxu0 %v74
    %v482 = vpop.f32.mrf.mxu0
    %v483 = vadd.f32 %v463, %v482
    %484 = vdwg.mxu0
    %485 = vmatpush.msra.mxu0 %v206
    %486 = vmatpush.msra.mxu0 %v204
    %487 = vmatpush.msra.mxu0 %v202
    %488 = vmatpush.msra.mxu0 %v200
    %489 = vmatpush.msra.mxu0 %v198
    %490 = vmatpush.msra.mxu0 %v196
    %491 = vmatpush.msra.mxu0 %v194
    %492 = vmatpush.msra.mxu0 %v192
    %493 = vmatpush.msra.mxu0 %v190
    %494 = vmatpush.msra.mxu0 %v188
    %495 = vmatpush.msra.mxu0 %v186
    %496 = vmatpush.msra.mxu0 %v184
    %497 = vmatpush.msra.mxu0 %v182
    %498 = vmatpush.msra.mxu0 %v180
    %499 = vmatpush.msra.mxu0 %v178
    %500 = vmatpush.msra.mxu0 %v176
    %501 = vmatmul.f32.gmra.mxu0 %v75
    %v502 = vpop.f32.mrf.mxu0
    %v503 = vadd.f32 %v483, %v502
    %504 = vdwg.mxu0
    %505 = vmatpush.msra.mxu0 %v238
    %506 = vmatpush.msra.mxu0 %v236
    %507 = vmatpush.msra.mxu0 %v234
    %508 = vmatpush.msra.mxu0 %v232
    %509 = vmatpush.msra.mxu0 %v230
    %510 = vmatpush.msra.mxu0 %v228
    %511 = vmatpush.msra.mxu0 %v226
    %512 = vmatpush.msra.mxu0 %v224
    %513 = vmatpush.msra.mxu0 %v222
    %514 = vmatpush.msra.mxu0 %v220
    %515 = vmatpush.msra.mxu0 %v218
    %516 = vmatpush.msra.mxu0 %v216
    %517 = vmatpush.msra.mxu0 %v214
    %518 = vmatpush.msra.mxu0 %v212
    %519 = vmatpush.msra.mxu0 %v210
    %520 = vmatpush.msra.mxu0 %v208
    %521 = vmatmul.f32.gmra.mxu0 %v76
    %v522 = vpop.f32.mrf.mxu0
    %v523 = vadd.f32 %v503, %v522
    %524 = vdwg.mxu0
    %525 = vmatpush.msra.mxu0 %v270
    %526 = vmatpush.msra.mxu0 %v268
    %527 = vmatpush.msra.mxu0 %v266
    %528 = vmatpush.msra.mxu0 %v264
    %529 = vmatpush.msra.mxu0 %v262
    %530 = vmatpush.msra.mxu0 %v260
    %531 = vmatpush.msra.mxu0 %v258
    %532 = vmatpush.msra.mxu0 %v256
    %533 = vmatpush.msra.mxu0 %v254
    %534 = vmatpush.msra.mxu0 %v252
    %535 = vmatpush.msra.mxu0 %v250
    %536 = vmatpush.msra.mxu0 %v248
    %537 = vmatpush.msra.mxu0 %v246
    %538 = vmatpush.msra.mxu0 %v244
    %539 = vmatpush.msra.mxu0 %v242
    %540 = vmatpush.msra.mxu0 %v240
    %541 = vmatmul.f32.gmra.mxu0 %v77
    %v542 = vpop.f32.mrf.mxu0
    %v543 = vadd.f32 %v523, %v542
    %544 = vdwg.mxu0
    %545 = vmatpush.msra.mxu0 0.0
    %546 = vmatpush.msra.mxu0 0.0
    %547 = vmatpush.msra.mxu0 0.0
    %548 = vmatpush.msra.mxu0 0.0
    %549 = vmatpush.msra.mxu0 0.0
    %550 = vmatpush.msra.mxu0 0.0
    %551 = vmatpush.msra.mxu0 0.0
    %552 = vmatpush.msra.mxu0 0.0
    %553 = vmatpush.msra.mxu0 0.0
    %554 = vmatpush.msra.mxu0 0.0
    %555 = vmatpush.msra.mxu0 0.0
    %556 = vmatpush.msra.mxu0 0.0
    %557 = vmatpush.msra.mxu0 0.0
    %558 = vmatpush.msra.mxu0 0.0
    %559 = vmatpush.msra.mxu0 %v274
    %560 = vmatpush.msra.mxu0 %v272
    %561 = vmatmul.f32.gmra.mxu0 %v283
    %v562 = vpop.f32.mrf.mxu0
    %v563 = vadd.f32 %v543, %v562
    %564 = vdwg.mxu0
    %v565 = vmax.f32 %v423, 0.0
    %v566 = vmax.f32 %v563, 0.0
    %v567 = vld [vmem:[#allocation7] sm:$0xff]
    %v568 = vld [vmem:[#allocation7 + $0x8] sm:$0xff]
    %v569 = vld [vmem:[#allocation7 + $0x10] sm:$0xff]
    %v570 = vld [vmem:[#allocation7 + $0x18] sm:$0xff]
    %v571 = vld [vmem:[#allocation7 + $0x20] sm:$0xff]
    %v572 = vld [vmem:[#allocation7 + $0x28] sm:$0xff]
    %v573 = vld [vmem:[#allocation7 + $0x30] sm:$0xff]
    %v574 = vld [vmem:[#allocation7 + $0x38] sm:$0xff]
    %v575 = vld [vmem:[#allocation7 + $0x40] sm:$0xff]
    %v576 = vld [vmem:[#allocation7 + $0x48] sm:$0xff]
    %v577 = vld [vmem:[#allocation7 + $0x50] sm:$0xff]
    %v578 = vld [vmem:[#allocation7 + $0x58] sm:$0xff]
    %v579 = vld [vmem:[#allocation7 + $0x60] sm:$0xff]
    %v580 = vld [vmem:[#allocation7 + $0x68] sm:$0xff]
    %v581 = vld [vmem:[#allocation7 + $0x70] sm:$0xff]
    %v582 = vld [vmem:[#allocation7 + $0x78] sm:$0xff]
    %v583 = vld [vmem:[#allocation7 + $0x80] sm:$0xff]
    %v584 = vld [vmem:[#allocation7 + $0x88] sm:$0xff]
    %v585 = vld [vmem:[#allocation7 + $0x90] sm:$0xff]
    %v586 = vld [vmem:[#allocation7 + $0x98] sm:$0xff]
    %v587 = vld [vmem:[#allocation7 + $0xa0] sm:$0xff]
    %v588 = vld [vmem:[#allocation7 + $0xa8] sm:$0xff]
    %v589 = vld [vmem:[#allocation7 + $0xb0] sm:$0xff]
    %v590 = vld [vmem:[#allocation7 + $0xb8] sm:$0xff]
    %v591 = vld [vmem:[#allocation7 + $0xc0] sm:$0xff]
    %v592 = vld [vmem:[#allocation7 + $0xc8] sm:$0xff]
    %v593 = vld [vmem:[#allocation7 + $0xd0] sm:$0xff]
    %v594 = vld [vmem:[#allocation7 + $0xd8] sm:$0xff]
    %v595 = vld [vmem:[#allocation7 + $0xe0] sm:$0xff]
    %v596 = vld [vmem:[#allocation7 + $0xe8] sm:$0xff]
    %v597 = vld [vmem:[#allocation7 + $0xf0] sm:$0xff]
    %v598 = vld [vmem:[#allocation7 + $0xf8] sm:$0xff]
    %v599 = vld [vmem:[%s4] sm:$0x1]
    %v601 = vperm.slane %v599, 0
    %603 = vmatpush.msra.mxu0 %v582
    %604 = vmatpush.msra.mxu0 %v581
    %605 = vmatpush.msra.mxu0 %v580
    %606 = vmatpush.msra.mxu0 %v579
    %607 = vmatpush.msra.mxu0 %v578
    %608 = vmatpush.msra.mxu0 %v577
    %609 = vmatpush.msra.mxu0 %v576
    %610 = vmatpush.msra.mxu0 %v575
    %611 = vmatpush.msra.mxu0 %v574
    %612 = vmatpush.msra.mxu0 %v573
    %613 = vmatpush.msra.mxu0 %v572
    %614 = vmatpush.msra.mxu0 %v571
    %615 = vmatpush.msra.mxu0 %v570
    %616 = vmatpush.msra.mxu0 %v569
    %617 = vmatpush.msra.mxu0 %v568
    %618 = vmatpush.msra.mxu0 %v567
    %619 = vmatmul.f32.gmra.mxu0 %v565
    %v620 = vpop.f32.mrf.mxu0
    %v621 = vadd.f32 %v601, %v620
    %622 = vdwg.mxu0
    %623 = vmatpush.msra.mxu0 %v598
    %624 = vmatpush.msra.mxu0 %v597
    %625 = vmatpush.msra.mxu0 %v596
    %626 = vmatpush.msra.mxu0 %v595
    %627 = vmatpush.msra.mxu0 %v594
    %628 = vmatpush.msra.mxu0 %v593
    %629 = vmatpush.msra.mxu0 %v592
    %630 = vmatpush.msra.mxu0 %v591
    %631 = vmatpush.msra.mxu0 %v590
    %632 = vmatpush.msra.mxu0 %v589
    %633 = vmatpush.msra.mxu0 %v588
    %634 = vmatpush.msra.mxu0 %v587
    %635 = vmatpush.msra.mxu0 %v586
    %636 = vmatpush.msra.mxu0 %v585
    %637 = vmatpush.msra.mxu0 %v584
    %638 = vmatpush.msra.mxu0 %v583
    %639 = vmatmul.f32.gmra.mxu0 %v566
    %v640 = vpop.f32.mrf.mxu0
    %v641 = vadd.f32 %v621, %v640
    %642 = vdwg.mxu0
    %v643 = vmax.f32 %v641, 0.0
    %v644 = vld [vmem:[%s5] sm:$0x1]
    %v646 = vperm.slane %v644, 0
    %v648 = vmul.f32 %v643, %v646
    %649 = vadd.xlane.f32.xlu0 %v648
    %v650 = vpop.xlane.xlu0 %649
    %s651 = sld [smem:[#allocation2]]
    %v652 = vstv %s651
    %v653 = vadd.f32 %v650, %v652
    %vm654 = vcmask 7168
    %655 = vst.msk [vmem:[%s7] sm:$0xff] %vm654, %v653
    // Predicated region
    $region42: #{tpu_custom_call.1} parent=1 // pred_check
      _
    $region43: #{tpu_custom_call.1} parent=1 // pred_check_branch
      %657 = sbr.rel (0) target = $region45
    $region44: #{tpu_custom_call.1} parent=1 // pred_region
      _
    $region45: #{tpu_custom_call.1} parent=1 // pred_fallthru
      _
    // Predicated region
    $region46: #{tpu_custom_call.1} parent=1 // pred_check
      _
    $region47: #{tpu_custom_call.1} parent=1 // pred_check_branch
      %659 = sbr.rel (0) target = $region49
    $region48: #{tpu_custom_call.1} parent=1 // pred_region
      _
    $region49: #{tpu_custom_call.1} parent=1 // pred_fallthru
      _
    %660 = vsyncpa [#allocation4], 1
    %661 = vsyncpa [#allocation6], 1

</llo_original>
